<compile_context>
chip_gen: v7x
topology: tpu7x:2x2x1
jax: 0.10.0
libtpu: 0.0.40
codegen_flags: <defaults>
</compile_context>

<pallas_src>
from functools import partial

import jax
import jax.numpy as jnp
from jax import lax
from jax.experimental import pallas as pl
from jax.experimental.pallas import tpu as pltpu


MVN_EPS = 1e-5


def _featextractor_kernel(lhs_ref, w_ref, o_ref, *, Bb, R, F, C, inv_n):
    # lhs_ref: (Bb*R, F*K) f32   -- F frames folded per row (lane-dense im2col view)
    # w_ref:   (F*K, F*C)  bf16  -- block-diagonal kron(I_F, W)
    # o_ref:   (Bb, R, F*C) out  -- MVN-normalized features; un-folds to (Bb, T, C)
    lhs = lhs_ref[...].astype(jnp.bfloat16)

    # Conv1d as one dense MXU matmul over all Bb*R rows (= Bb*T frames) of this block.
    f = jnp.dot(lhs, w_ref[...], preferred_element_type=jnp.float32)    # (Bb*R, F*C)
    f3 = f.reshape(Bb, R, F * C)

    # One-pass per-utterance statistics over time: sum & sum-of-squares over the row axis,
    # then fold the F frame groups along lanes into per-channel sums.
    s1 = jnp.sum(f3, axis=1)                                            # (Bb, F*C)
    s2 = jnp.sum(f3 * f3, axis=1)                                       # (Bb, F*C)
    s1c = s1[:, 0:C]
    s2c = s2[:, 0:C]
    for g in range(1, F):
        s1c = s1c + s1[:, g * C:(g + 1) * C]
        s2c = s2c + s2[:, g * C:(g + 1) * C]

    mean = s1c * inv_n                                                  # (Bb, C)
    var = jnp.maximum(s2c * inv_n - mean * mean, 0.0)
    inv_std = lax.rsqrt(var + MVN_EPS)

    # Broadcast per-channel stats back across the F lane groups.
    if F > 1:
        mean_b = jnp.concatenate([mean] * F, axis=-1)                   # (Bb, F*C)
        inv_b = jnp.concatenate([inv_std] * F, axis=-1)
    else:
        mean_b, inv_b = mean, inv_std

    # NOTE: Conv1d bias intentionally NOT added -- cancelled exactly by the MVN.
    o_ref[...] = ((f3 - mean_b[:, None, :]) * inv_b[:, None, :]).astype(o_ref.dtype)


def _pick_fold(T, C):
    """Frames folded per row so the output last dim (F*C) is a lane-dense multiple of 128."""
    if C % 128 == 0:
        return 1
    for f in (8, 4, 2):
        if T % f == 0 and (f * C) % 128 == 0:
            return f
    for f in (8, 4, 2):
        if T % f == 0:
            return f
    return 1


def _pick_batch_block(B, R, fk, fc, out_bytes, budget_bytes):
    """Largest utterance block Bb that (a) divides B, (b) keeps the 2-D LHS block
    sublane-legal, (c) fits the VMEM budget (padded-free since layouts are lane-dense),
    preferring Bb <= B//2 so the 'parallel' axis has >= 2 steps (v7x 2-TC sharding)."""
    def legal(bb):
        return B % bb == 0 and (bb == B or (bb * R) % 8 == 0)

    def step_bytes(bb):
        rows = bb * R
        lhs = 2 * rows * fk * 4          # f32 LHS, double-buffered
        lhs_cast = rows * fk * 2         # in-kernel bf16 copy
        w = 2 * fk * fc * 2              # bf16 weight, double-buffered
        out = 2 * rows * fc * out_bytes  # output, double-buffered
        tmps = 2 * rows * fc * 4         # f32 matmul result + normalized temp
        return lhs + lhs_cast + w + out + tmps

    legal_bbs = [bb for bb in range(1, B + 1) if legal(bb)]
    fitting = [bb for bb in legal_bbs if step_bytes(bb) <= budget_bytes]
    multi = [bb for bb in fitting if bb <= B // 2] if B >= 2 else []
    if multi:
        return max(multi)
    if fitting:
        return max(fitting)
    return min(legal_bbs)  # nothing fits the budget; smallest legal block


def feat_extractor_forward(x, weight, bias, *, stride, out_dtype=jnp.float32):
    """x: (B, 1, L) f32, weight: (C, 1, K), bias: (C,). Returns (B, T, C).

    `bias` is accepted for API parity with nn.Conv1d but is a mathematical no-op under
    per-utterance MVN, so it is not passed to the kernel.
    """
    del bias  # exactly cancelled by MVN
    B, Cin, L = x.shape
    assert Cin == 1
    C, _, K = weight.shape
    T = (L - K) // stride + 1

    F = _pick_fold(T, C)
    R = T // F

    # --- glue: lane-dense folded patch matrix, kept in f32 (no wrapper bf16 copy) ------
    wave = x[:, 0, :]
    if stride == K:
        # Non-overlapping frames: the folded patch matrix is a pure reshape.
        lhs = wave[:, :T * K].reshape(B * R, F * K)
    else:
        # General stride: K strided slices (no gather), then a free reshape.
        cols = [wave[:, k:k + stride * T:stride] for k in range(K)]     # K x (B, T)
        lhs = jnp.stack(cols, axis=-1).reshape(B * R, F * K)

    # Block-diagonal weight kron(I_F, W) in matmul layout, bf16 for the MXU.
    w_kc = jnp.transpose(weight[:, 0, :], (1, 0)).astype(jnp.bfloat16)  # (K, C)
    eye = jnp.eye(F, dtype=jnp.bfloat16)
    w_bd = (eye[:, None, :, None] * w_kc[None, :, None, :]).reshape(F * K, F * C)

    # --- generation-aware VMEM sizing ---------------------------------------------------
    try:
        vmem_cap = int(pltpu.get_tpu_info().vmem_capacity_bytes)
    except Exception:
        vmem_cap = 64 * 1024 * 1024  # conservative fallback
    vmem_limit = min(vmem_cap * 3 // 4, 96 * 1024 * 1024)   # ~48 MiB on v7x, 96 MiB on v5e/v6e
    block_budget = vmem_limit // 3

    out_bytes = jnp.dtype(out_dtype).itemsize
    Bb = _pick_batch_block(B, R, F * K, F * C, out_bytes, block_budget)

    kernel = partial(_featextractor_kernel, Bb=Bb, R=R, F=F, C=C, inv_n=1.0 / T)

    # --- hot path in Pallas: matmul conv + fused one-pass MVN, lane-dense store ---------
    out = pl.pallas_call(
        kernel,
        out_shape=jax.ShapeDtypeStruct((B, R, F * C), out_dtype),
        grid_spec=pltpu.PrefetchScalarGridSpec(
            num_scalar_prefetch=0,
            grid=(B // Bb,),
            in_specs=[
                pl.BlockSpec((Bb * R, F * K), lambda i: (i, 0)),
                pl.BlockSpec((F * K, F * C), lambda i: (0, 0)),
            ],
            out_specs=pl.BlockSpec((Bb, R, F * C), lambda i: (i, 0, 0)),
        ),
        compiler_params=pltpu.CompilerParams(
            dimension_semantics=("parallel",),
            vmem_limit_bytes=vmem_limit,
        ),
    )(lhs, w_bd)

    # Free row-major un-fold back to (B, T, C).
    return out.reshape(B, T, C)


def _reference_forward(x, weight, bias, *, stride, round_inputs_to_bf16=False):
    """Plain-JAX reference matching the PyTorch semantics (NCW conv -> MVN -> transpose)."""
    if round_inputs_to_bf16:
        x = x.astype(jnp.bfloat16).astype(jnp.float32)
        weight = weight.astype(jnp.bfloat16).astype(jnp.float32)
    f = lax.conv_general_dilated(
        x, weight, window_strides=(stride,), padding="VALID",
        dimension_numbers=("NCH", "OIH", "NCH"))                        # (B, C, T)
    f = f + bias[None, :, None]
    mean = jnp.mean(f, axis=2, keepdims=True)
    var = jnp.mean((f - mean) ** 2, axis=2, keepdims=True)
    f = (f - mean) * lax.rsqrt(var + MVN_EPS)
    return jnp.transpose(f, (0, 2, 1))                                  # (B, T, C)


if __name__ == "__main__":
    B, L = 2, 256          # batch, waveform length
    C, K, S = 32, 16, 16   # conv out-channels, kernel size, stride  ->  T = 16

    key = jax.random.PRNGKey(0)
    kx, kw, kb = jax.random.split(key, 3)
    x = jax.random.normal(kx, (B, 1, L), dtype=jnp.float32)
    weight = 0.1 * jax.random.normal(kw, (C, 1, K), dtype=jnp.float32)
    bias = 0.01 * jax.random.normal(kb, (C,), dtype=jnp.float32)

    out = feat_extractor_forward(x, weight, bias, stride=S)
    out = jax.block_until_ready(out)
    assert out.shape == (B, (L - K) // S + 1, C)

    # Tight check vs. a reference that sees the same bf16-rounded matmul inputs.
    ref_bf16 = jax.block_until_ready(
        _reference_forward(x, weight, bias, stride=S, round_inputs_to_bf16=True))
    assert jnp.allclose(out, ref_bf16, atol=1e-3, rtol=1e-3)

    # Loose check vs. the exact f32 PyTorch-module semantics.
    ref_f32 = jax.block_until_ready(_reference_forward(x, weight, bias, stride=S))
    assert jnp.allclose(out, ref_f32, atol=3e-2, rtol=3e-2)

    print("KERNEL_OK")
</pallas_src>

<mosaic_0001>
module attributes {stable_mosaic.version = 11 : i64} {
  func.func @_featextractor_kernel(%arg0: i32, %arg1: memref<4x128xf32, #tpu.memory_space<vmem>>, %arg2: memref<128x256xbf16, #tpu.memory_space<vmem>>, %arg3: memref<2x2x256xf32, #tpu.memory_space<vmem>>) attributes {dimension_semantics = [#tpu.dimension_semantics<parallel>], iteration_bounds = array<i64: 1>, scalar_prefetch = 0 : i64, scratch_operands = 0 : i64, tpu.core_type = #tpu.core_type<tc>, window_params = [{transform_indices = @transform_0, window_bounds = array<i64: 4, 128>}, {pipeline_mode = #tpu.pipeline_mode<synchronous>, transform_indices = @transform_1, window_bounds = array<i64: 128, 256>}, {transform_indices = @transform_2, window_bounds = array<i64: 2, 2, 256>}]} {
    %c0 = arith.constant 0 : index
    %c0_0 = arith.constant 0 : index
    %0 = vector.load %arg1[%c0, %c0_0] : memref<4x128xf32, #tpu.memory_space<vmem>>, vector<4x128xf32>
    %1 = arith.truncf %0 : vector<4x128xf32> to vector<4x128xbf16>
    %c0_1 = arith.constant 0 : index
    %c0_2 = arith.constant 0 : index
    %2 = vector.load %arg2[%c0_1, %c0_2] : memref<128x256xbf16, #tpu.memory_space<vmem>>, vector<128x256xbf16>
    %cst = arith.constant dense<0.000000e+00> : vector<4x256xf32>
    %3 = tpu.matmul %1, %2, %cst {dimension_numbers = #tpu.dot_dimension_numbers<[1], [0], [0], [1], [0, 0, 1, 1], [], []>} : vector<4x128xbf16>, vector<128x256xbf16>, vector<4x256xf32> -> vector<4x256xf32>
    %4 = vector.shape_cast %3 : vector<4x256xf32> to vector<2x2x256xf32>
    %cst_3 = arith.constant dense<0.000000e+00> : vector<2x256xf32>
    %5 = vector.multi_reduction <add>, %4, %cst_3 [1] : vector<2x2x256xf32> to vector<2x256xf32>
    %6 = arith.mulf %4, %4 : vector<2x2x256xf32>
    %cst_4 = arith.constant dense<0.000000e+00> : vector<2x256xf32>
    %7 = vector.multi_reduction <add>, %6, %cst_4 [1] : vector<2x2x256xf32> to vector<2x256xf32>
    %8 = vector.extract_strided_slice %5 {offsets = [0, 0], sizes = [2, 32], strides = [1, 1]} : vector<2x256xf32> to vector<2x32xf32>
    %9 = vector.extract_strided_slice %7 {offsets = [0, 0], sizes = [2, 32], strides = [1, 1]} : vector<2x256xf32> to vector<2x32xf32>
    %10 = vector.extract_strided_slice %5 {offsets = [0, 32], sizes = [2, 32], strides = [1, 1]} : vector<2x256xf32> to vector<2x32xf32>
    %11 = arith.addf %8, %10 : vector<2x32xf32>
    %12 = vector.extract_strided_slice %7 {offsets = [0, 32], sizes = [2, 32], strides = [1, 1]} : vector<2x256xf32> to vector<2x32xf32>
    %13 = arith.addf %9, %12 : vector<2x32xf32>
    %14 = vector.extract_strided_slice %5 {offsets = [0, 64], sizes = [2, 32], strides = [1, 1]} : vector<2x256xf32> to vector<2x32xf32>
    %15 = arith.addf %11, %14 : vector<2x32xf32>
    %16 = vector.extract_strided_slice %7 {offsets = [0, 64], sizes = [2, 32], strides = [1, 1]} : vector<2x256xf32> to vector<2x32xf32>
    %17 = arith.addf %13, %16 : vector<2x32xf32>
    %18 = vector.extract_strided_slice %5 {offsets = [0, 96], sizes = [2, 32], strides = [1, 1]} : vector<2x256xf32> to vector<2x32xf32>
    %19 = arith.addf %15, %18 : vector<2x32xf32>
    %20 = vector.extract_strided_slice %7 {offsets = [0, 96], sizes = [2, 32], strides = [1, 1]} : vector<2x256xf32> to vector<2x32xf32>
    %21 = arith.addf %17, %20 : vector<2x32xf32>
    %22 = vector.extract_strided_slice %5 {offsets = [0, 128], sizes = [2, 32], strides = [1, 1]} : vector<2x256xf32> to vector<2x32xf32>
    %23 = arith.addf %19, %22 : vector<2x32xf32>
    %24 = vector.extract_strided_slice %7 {offsets = [0, 128], sizes = [2, 32], strides = [1, 1]} : vector<2x256xf32> to vector<2x32xf32>
    %25 = arith.addf %21, %24 : vector<2x32xf32>
    %26 = vector.extract_strided_slice %5 {offsets = [0, 160], sizes = [2, 32], strides = [1, 1]} : vector<2x256xf32> to vector<2x32xf32>
    %27 = arith.addf %23, %26 : vector<2x32xf32>
    %28 = vector.extract_strided_slice %7 {offsets = [0, 160], sizes = [2, 32], strides = [1, 1]} : vector<2x256xf32> to vector<2x32xf32>
    %29 = arith.addf %25, %28 : vector<2x32xf32>
    %30 = vector.extract_strided_slice %5 {offsets = [0, 192], sizes = [2, 32], strides = [1, 1]} : vector<2x256xf32> to vector<2x32xf32>
    %31 = arith.addf %27, %30 : vector<2x32xf32>
    %32 = vector.extract_strided_slice %7 {offsets = [0, 192], sizes = [2, 32], strides = [1, 1]} : vector<2x256xf32> to vector<2x32xf32>
    %33 = arith.addf %29, %32 : vector<2x32xf32>
    %34 = vector.extract_strided_slice %5 {offsets = [0, 224], sizes = [2, 32], strides = [1, 1]} : vector<2x256xf32> to vector<2x32xf32>
    %35 = arith.addf %31, %34 : vector<2x32xf32>
    %36 = vector.extract_strided_slice %7 {offsets = [0, 224], sizes = [2, 32], strides = [1, 1]} : vector<2x256xf32> to vector<2x32xf32>
    %37 = arith.addf %33, %36 : vector<2x32xf32>
    %cst_5 = arith.constant 6.250000e-02 : f32
    %38 = vector.broadcast %cst_5 : f32 to vector<2x32xf32>
    %39 = arith.mulf %35, %38 : vector<2x32xf32>
    %cst_6 = arith.constant 6.250000e-02 : f32
    %40 = vector.broadcast %cst_6 : f32 to vector<2x32xf32>
    %41 = arith.mulf %37, %40 : vector<2x32xf32>
    %42 = arith.mulf %39, %39 : vector<2x32xf32>
    %43 = arith.subf %41, %42 : vector<2x32xf32>
    %cst_7 = arith.constant 0.000000e+00 : f32
    %44 = vector.broadcast %cst_7 : f32 to vector<2x32xf32>
    %45 = arith.maximumf %43, %44 : vector<2x32xf32>
    %cst_8 = arith.constant 9.99999974E-6 : f32
    %46 = vector.broadcast %cst_8 : f32 to vector<2x32xf32>
    %47 = arith.addf %45, %46 : vector<2x32xf32>
    %48 = math.rsqrt %47 : vector<2x32xf32>
    %49 = tpu.concatenate %39, %39, %39, %39, %39, %39, %39, %39 in 1 : vector<2x32xf32>, vector<2x32xf32>, vector<2x32xf32>, vector<2x32xf32>, vector<2x32xf32>, vector<2x32xf32>, vector<2x32xf32>, vector<2x32xf32> -> vector<2x256xf32>
    %50 = tpu.concatenate %48, %48, %48, %48, %48, %48, %48, %48 in 1 : vector<2x32xf32>, vector<2x32xf32>, vector<2x32xf32>, vector<2x32xf32>, vector<2x32xf32>, vector<2x32xf32>, vector<2x32xf32>, vector<2x32xf32> -> vector<2x256xf32>
    %51 = vector.shape_cast %49 : vector<2x256xf32> to vector<2x1x256xf32>
    %52 = vector.broadcast %51 : vector<2x1x256xf32> to vector<2x2x256xf32>
    %53 = arith.subf %4, %52 : vector<2x2x256xf32>
    %54 = vector.shape_cast %50 : vector<2x256xf32> to vector<2x1x256xf32>
    %55 = vector.broadcast %54 : vector<2x1x256xf32> to vector<2x2x256xf32>
    %56 = arith.mulf %53, %55 : vector<2x2x256xf32>
    %c0_9 = arith.constant 0 : index
    %c0_10 = arith.constant 0 : index
    %c0_11 = arith.constant 0 : index
    %57 = vector.load %arg3[%c0_9, %c0_10, %c0_11] : memref<2x2x256xf32, #tpu.memory_space<vmem>>, vector<2x2x256xf32>
    tpu.vector_store %arg3[%c0_9, %c0_10, %c0_11], %56 {strides = array<i32>} : memref<2x2x256xf32, #tpu.memory_space<vmem>>, vector<2x2x256xf32>,
    return
  }
  func.func @transform_0(%arg0: i32) -> (i32, i32) {
    %c0_i32 = arith.constant 0 : i32
    %c0_i32_0 = arith.constant 0 : i32
    return %arg0, %c0_i32 : i32, i32
  }
  func.func @transform_1(%arg0: i32) -> (i32, i32) {
    %c0_i32 = arith.constant 0 : i32
    %c0_i32_0 = arith.constant 0 : i32
    %c0_i32_1 = arith.constant 0 : i32
    return %c0_i32, %c0_i32_0 : i32, i32
  }
  func.func @transform_2(%arg0: i32) -> (i32, i32, i32) {
    %c0_i32 = arith.constant 0 : i32
    %c0_i32_0 = arith.constant 0 : i32
    %c0_i32_1 = arith.constant 0 : i32
    return %arg0, %c0_i32, %c0_i32_0 : i32, i32, i32
  }
}

</mosaic_0001>

<llo_original>
// kernel: tpu_custom_call.1
$region0: #{tpu_custom_call.1}
  #allocation0 [shape = 'u32[]', space=smem, size = 0x4, offset = 0x4, fixed_abs, tag = 'smem constant byte address 0x4 - core index']
  #allocation1 [shape = 'u32[144,128]{1,0:T(1,128)}', space=vmem, size = 0x12000, scoped, tag = 'internal scratch']
  %s0 = inlined_call_operand.hbm [shape: f32[4,128], index: 0, kind: input, shape index: {}]
  %s1 = inlined_call_operand.hbm [shape: bf16[128,256], index: 1, kind: input, shape index: {}]
  %s2 = inlined_call_operand.hbm [shape: f32[2,2,256], index: 2, kind: output, shape index: {}]
  %s3 = sld [smem:[#allocation0]]
  $region26: #{tpu_custom_call.1} parent=0
    _
  %s5 = ssub.s32 1, %s3
  %s6 = scalar_select 0, %s5, %s3
  $region1: #{tpu_custom_call.1} parent=0
    #allocation2 [shape = 'u8[2048]{0}', space=vmem, size = 0x800, scoped, tag = 'input window, operand 0, single buffered']
    #allocation3 [shape = 's32[1]{0}', space=sflag, size = 0x4, scoped, tag = 'scoped memory for tpu_custom_call.1']
    #allocation4 [shape = 's32[1]{0}', space=sflag, size = 0x4, scoped, tag = 'scoped memory for tpu_custom_call.1']
    #allocation5 [shape = 'u8[65536]{0}', space=vmem, size = 0x10000, scoped, tag = 'input window, operand 1, single buffered']
    #allocation6 [shape = 's32[1]{0}', space=sflag, size = 0x4, scoped, tag = 'scoped memory for tpu_custom_call.1']
    #allocation7 [shape = 'u8[4096]{0}', space=vmem, size = 0x1000, scoped, tag = 'output window, operand 0, single buffered']
    %7 = vsyncpa [#allocation3], 0
    %8 = vsyncpa [#allocation6], 0
    %9 = vsyncpa [#allocation4], 0
    // Predicated region
    $region2: #{tpu_custom_call.1} parent=1 // pred_check
      _
    $region3: #{tpu_custom_call.1} parent=1 // pred_check_branch
      %11 = sbr.rel (0) target = $region5
    $region4: #{tpu_custom_call.1} parent=1 // pred_region
      %s13 = ssub.s32 64, 64
      %14 = vsyncadd [#allocation3], %s13
      %s16 = sshll.u32 [#allocation2], 4
      %s17 = int_to_ptr.vmem [resolvable:$true] %s16
      %19 = dma.hbm_to_vmem [thread:$0]  %s0, 64, %s17, [#allocation3]
    $region5: #{tpu_custom_call.1} parent=1 // pred_fallthru
      _
    // Predicated region
    $region6: #{tpu_custom_call.1} parent=1 // pred_check
      _
    $region7: #{tpu_custom_call.1} parent=1 // pred_check_branch
      %21 = sbr.rel (0) target = $region9
    $region8: #{tpu_custom_call.1} parent=1 // pred_region
      %s23 = ssub.s32 2048, 2048
      %24 = vsyncadd [#allocation6], %s23
      %s25 = sshll.u32 [#allocation5], 4
      %s26 = int_to_ptr.vmem [resolvable:$true] %s25
      %31 = dma.hbm_to_vmem [thread:$0]  %s1, 2048, %s26, [#allocation6], 128, 128, 8
    $region9: #{tpu_custom_call.1} parent=1 // pred_fallthru
      _
    // Predicated region
    $region10: #{tpu_custom_call.1} parent=1 // pred_check
      _
    $region11: #{tpu_custom_call.1} parent=1 // pred_check_branch
      %33 = sbr.rel (0) target = $region13
    $region12: #{tpu_custom_call.1} parent=1 // pred_region
      %34 = dma.done [#allocation3], 64
    $region13: #{tpu_custom_call.1} parent=1 // pred_fallthru
      _
    // Predicated region
    $region14: #{tpu_custom_call.1} parent=1 // pred_check
      _
    $region15: #{tpu_custom_call.1} parent=1 // pred_check_branch
      %36 = sbr.rel (0) target = $region17
    $region16: #{tpu_custom_call.1} parent=1 // pred_region
      %37 = dma.done [#allocation6], 2048
    $region17: #{tpu_custom_call.1} parent=1 // pred_fallthru
      _
    %v39 = vld [vmem:[#allocation2] sm:$0xf]
    %v40 = vpack.c.bf16 %v39, %v39
    %v41 = vld [vmem:[#allocation5] sm:$0xff]
    %v42 = vld [vmem:[#allocation5 + $0x8] sm:$0xff]
    %v43 = vld [vmem:[#allocation5 + $0x10] sm:$0xff]
    %v44 = vld [vmem:[#allocation5 + $0x18] sm:$0xff]
    %v45 = vld [vmem:[#allocation5 + $0x20] sm:$0xff]
    %v46 = vld [vmem:[#allocation5 + $0x28] sm:$0xff]
    %v47 = vld [vmem:[#allocation5 + $0x30] sm:$0xff]
    %v48 = vld [vmem:[#allocation5 + $0x38] sm:$0xff]
    %v49 = vld [vmem:[#allocation5 + $0x40] sm:$0xff]
    %v50 = vld [vmem:[#allocation5 + $0x48] sm:$0xff]
    %v51 = vld [vmem:[#allocation5 + $0x50] sm:$0xff]
    %v52 = vld [vmem:[#allocation5 + $0x58] sm:$0xff]
    %v53 = vld [vmem:[#allocation5 + $0x60] sm:$0xff]
    %v54 = vld [vmem:[#allocation5 + $0x68] sm:$0xff]
    %v55 = vld [vmem:[#allocation5 + $0x70] sm:$0xff]
    %v56 = vld [vmem:[#allocation5 + $0x78] sm:$0xff]
    %v73 = vunpack.c.l.b16 %v41
    %v74 = vunpack.c.h.b16 %v41
    %v75 = vunpack.c.l.b16 %v42
    %v76 = vunpack.c.h.b16 %v42
    %v77 = vunpack.c.l.b16 %v43
    %v78 = vunpack.c.h.b16 %v43
    %v79 = vunpack.c.l.b16 %v44
    %v80 = vunpack.c.h.b16 %v44
    %v81 = vunpack.c.l.b16 %v45
    %v82 = vunpack.c.h.b16 %v45
    %v83 = vunpack.c.l.b16 %v46
    %v84 = vunpack.c.h.b16 %v46
    %v85 = vunpack.c.l.b16 %v47
    %v86 = vunpack.c.h.b16 %v47
    %v87 = vunpack.c.l.b16 %v48
    %v88 = vunpack.c.h.b16 %v48
    %v89 = vunpack.c.l.b16 %v49
    %v90 = vunpack.c.h.b16 %v49
    %v91 = vunpack.c.l.b16 %v50
    %v92 = vunpack.c.h.b16 %v50
    %v93 = vunpack.c.l.b16 %v51
    %v94 = vunpack.c.h.b16 %v51
    %v95 = vunpack.c.l.b16 %v52
    %v96 = vunpack.c.h.b16 %v52
    %v97 = vunpack.c.l.b16 %v53
    %v98 = vunpack.c.h.b16 %v53
    %v99 = vunpack.c.l.b16 %v54
    %v100 = vunpack.c.h.b16 %v54
    %v101 = vunpack.c.l.b16 %v55
    %v102 = vunpack.c.h.b16 %v55
    %v103 = vunpack.c.l.b16 %v56
    %v104 = vunpack.c.h.b16 %v56
    %v105 = vpack.c.b16 %v75, %v73
    %v106 = vpack.c.b16 %v76, %v74
    %v107 = vpack.c.b16 %v79, %v77
    %v108 = vpack.c.b16 %v80, %v78
    %v109 = vpack.c.b16 %v83, %v81
    %v110 = vpack.c.b16 %v84, %v82
    %v111 = vpack.c.b16 %v87, %v85
    %v112 = vpack.c.b16 %v88, %v86
    %v113 = vpack.c.b16 %v91, %v89
    %v114 = vpack.c.b16 %v92, %v90
    %v115 = vpack.c.b16 %v95, %v93
    %v116 = vpack.c.b16 %v96, %v94
    %v117 = vpack.c.b16 %v99, %v97
    %v118 = vpack.c.b16 %v100, %v98
    %v119 = vpack.c.b16 %v103, %v101
    %v120 = vpack.c.b16 %v104, %v102
    %137 = vmatprep.subr.bf16.mxu0 %v106
    %138 = vmatpush1.bf16.msra.mxu0 %v105
    %139 = vmatprep.subr.bf16.mxu0 %v108
    %140 = vmatpush1.bf16.msra.mxu0 %v107
    %141 = vmatprep.subr.bf16.mxu0 %v110
    %142 = vmatpush1.bf16.msra.mxu0 %v109
    %143 = vmatprep.subr.bf16.mxu0 %v112
    %144 = vmatpush1.bf16.msra.mxu0 %v111
    %145 = vmatprep.subr.bf16.mxu0 %v114
    %146 = vmatpush1.bf16.msra.mxu0 %v113
    %147 = vmatprep.subr.bf16.mxu0 %v116
    %148 = vmatpush1.bf16.msra.mxu0 %v115
    %149 = vmatprep.subr.bf16.mxu0 %v118
    %150 = vmatpush1.bf16.msra.mxu0 %v117
    %151 = vmatprep.subr.bf16.mxu0 %v120
    %152 = vmatpush1.bf16.msra.mxu0 %v119
    %153 = vmatprep.subr.bf16.mxu0 0
    %154 = vmatpush1.bf16.msra.mxu0 0
    %155 = vmatprep.subr.bf16.mxu0 0
    %156 = vmatpush1.bf16.msra.mxu0 0
    %157 = vmatprep.subr.bf16.mxu0 0
    %158 = vmatpush1.bf16.msra.mxu0 0
    %159 = vmatprep.subr.bf16.mxu0 0
    %160 = vmatpush1.bf16.msra.mxu0 0
    %161 = vmatprep.subr.bf16.mxu0 0
    %162 = vmatpush1.bf16.msra.mxu0 0
    %163 = vmatprep.subr.bf16.mxu0 0
    %164 = vmatpush1.bf16.msra.mxu0 0
    %165 = vmatprep.subr.bf16.mxu0 0
    %166 = vmatpush1.bf16.msra.mxu0 0
    %167 = vmatprep.subr.bf16.mxu0 0
    %168 = vmatpush1.bf16.msra.mxu0 0
    %169 = vmatprep.mubr.bf16.mxu0 0
    %170 = vmatmul.mubr.bf16.gmra.mrb[0].mxu0 %v40
    %v171 = vpop.f32.mrb[0].mxu0
    %v172 = vadd.f32 0.0, %v171
    %v173 = vpop.f32.mrb[0].mxu0
    %v174 = vadd.f32 0.0, %v173
    %v175 = vpop.f32.mrb[0].mxu0
    %v176 = vpop.f32.mrb[0].mxu0
    %177 = vdwg.mxu0
    %v180 = vcombine.low %v172, %v174
    %v182 = vunpack.c.l.s4 1983009808
    %v183 = vunpack.c.0.s8 %v182
    %v184 = vlaneseq
    %v185 = vshrl.u32 %v184, 7
    %v186 = vsub.s32 %v183, %v185
    %v187 = vrot.slane %v180, %v186
    %v188 = vcombine.high %v187, %v187
    %v192 = vunpack.c.l.s4 1983009808
    %v193 = vunpack.c.0.s8 %v192
    %v194 = vlaneseq
    %v195 = vshrl.u32 %v194, 7
    %v196 = vsub.s32 %v193, %v195
    %v197 = vrot.slane %v187, %v196
    %v198 = vcombine.high %v197, %v197
    %v200 = vunpack.c.l.s4 1983009808
    %v201 = vunpack.c.0.s8 %v200
    %v202 = vlaneseq
    %v203 = vshrl.u32 %v202, 7
    %v204 = vsub.s32 %v201, %v203
    %v205 = vrot.slane %v188, %v204
    %v206 = vcombine.high %v205, %v205
    %vm211 = vcmask 1041408
    %v212 = vsel %vm211, %v197, 0.0
    %v213 = vrot.slane %v212, 4
    %v214 = vadd.f32 %v212, %v213
    %v215 = vrot.slane %v214, 2
    %v216 = vadd.f32 %v214, %v215
    %v217 = vrot.slane %v216, 1
    %v218 = vadd.f32 %v216, %v217
    %v219 = vsel %vm211, %v198, 0.0
    %v220 = vrot.slane %v219, 4
    %v221 = vadd.f32 %v219, %v220
    %v222 = vrot.slane %v221, 2
    %v223 = vadd.f32 %v221, %v222
    %v224 = vrot.slane %v223, 1
    %v225 = vadd.f32 %v223, %v224
    %v226 = vsel %vm211, %v205, 0.0
    %v227 = vrot.slane %v226, 4
    %v228 = vadd.f32 %v226, %v227
    %v229 = vrot.slane %v228, 2
    %v230 = vadd.f32 %v228, %v229
    %v231 = vrot.slane %v230, 1
    %v232 = vadd.f32 %v230, %v231
    %v233 = vsel %vm211, %v206, 0.0
    %v234 = vrot.slane %v233, 4
    %v235 = vadd.f32 %v233, %v234
    %v236 = vrot.slane %v235, 2
    %v237 = vadd.f32 %v235, %v236
    %v238 = vrot.slane %v237, 1
    %v239 = vadd.f32 %v237, %v238
    %v240 = vmul.f32 %v187, %v187
    %v241 = vmul.f32 %v188, %v188
    %v245 = vunpack.c.l.s4 1983009808
    %v246 = vunpack.c.0.s8 %v245
    %v247 = vlaneseq
    %v248 = vshrl.u32 %v247, 7
    %v249 = vsub.s32 %v246, %v248
    %v250 = vrot.slane %v240, %v249
    %v251 = vcombine.high %v250, %v250
    %v253 = vunpack.c.l.s4 1983009808
    %v254 = vunpack.c.0.s8 %v253
    %v255 = vlaneseq
    %v256 = vshrl.u32 %v255, 7
    %v257 = vsub.s32 %v254, %v256
    %v258 = vrot.slane %v241, %v257
    %v259 = vcombine.high %v258, %v258
    %v264 = vsel %vm211, %v250, 0.0
    %v265 = vrot.slane %v264, 4
    %v266 = vadd.f32 %v264, %v265
    %v267 = vrot.slane %v266, 2
    %v268 = vadd.f32 %v266, %v267
    %v269 = vrot.slane %v268, 1
    %v270 = vadd.f32 %v268, %v269
    %v271 = vsel %vm211, %v251, 0.0
    %v272 = vrot.slane %v271, 4
    %v273 = vadd.f32 %v271, %v272
    %v274 = vrot.slane %v273, 2
    %v275 = vadd.f32 %v273, %v274
    %v276 = vrot.slane %v275, 1
    %v277 = vadd.f32 %v275, %v276
    %v278 = vsel %vm211, %v258, 0.0
    %v279 = vrot.slane %v278, 4
    %v280 = vadd.f32 %v278, %v279
    %v281 = vrot.slane %v280, 2
    %v282 = vadd.f32 %v280, %v281
    %v283 = vrot.slane %v282, 1
    %v284 = vadd.f32 %v282, %v283
    %v285 = vsel %vm211, %v259, 0.0
    %v286 = vrot.slane %v285, 4
    %v287 = vadd.f32 %v285, %v286
    %v288 = vrot.slane %v287, 2
    %v289 = vadd.f32 %v287, %v288
    %v290 = vrot.slane %v289, 1
    %v291 = vadd.f32 %v289, %v290
    %294 = vrot.lane.b32.xlu0 %v218, 96
    %v295 = vpop.permute.xlu0 %294
    %296 = vrot.lane.b32.xlu0 %v232, 96
    %v297 = vpop.permute.xlu0 %296
    %v300 = vadd.f32 %v218, %v295
    %v301 = vadd.f32 %v232, %v297
    %304 = vrot.lane.b32.xlu0 %v270, 96
    %v305 = vpop.permute.xlu0 %304
    %306 = vrot.lane.b32.xlu0 %v284, 96
    %v307 = vpop.permute.xlu0 %306
    %v310 = vadd.f32 %v270, %v305
    %v311 = vadd.f32 %v284, %v307
    %312 = vrot.lane.b32.xlu0 %v218, 64
    %v313 = vpop.permute.xlu0 %312
    %314 = vrot.lane.b32.xlu0 %v232, 64
    %v315 = vpop.permute.xlu0 %314
    %v318 = vadd.f32 %v300, %v313
    %v319 = vadd.f32 %v301, %v315
    %320 = vrot.lane.b32.xlu0 %v270, 64
    %v321 = vpop.permute.xlu0 %320
    %322 = vrot.lane.b32.xlu0 %v284, 64
    %v323 = vpop.permute.xlu0 %322
    %v326 = vadd.f32 %v310, %v321
    %v327 = vadd.f32 %v311, %v323
    %328 = vrot.lane.b32.xlu0 %v218, 32
    %v329 = vpop.permute.xlu0 %328
    %330 = vrot.lane.b32.xlu0 %v232, 32
    %v331 = vpop.permute.xlu0 %330
    %v334 = vadd.f32 %v318, %v329
    %v335 = vadd.f32 %v319, %v331
    %336 = vrot.lane.b32.xlu0 %v270, 32
    %v337 = vpop.permute.xlu0 %336
    %338 = vrot.lane.b32.xlu0 %v284, 32
    %v339 = vpop.permute.xlu0 %338
    %v342 = vadd.f32 %v326, %v337
    %v343 = vadd.f32 %v327, %v339
    %v344 = vadd.f32 %v334, %v225
    %v345 = vadd.f32 %v335, %v239
    %v346 = vadd.f32 %v342, %v277
    %v347 = vadd.f32 %v343, %v291
    %350 = vrot.lane.b32.xlu0 %v225, 96
    %v351 = vpop.permute.xlu0 %350
    %352 = vrot.lane.b32.xlu0 %v239, 96
    %v353 = vpop.permute.xlu0 %352
    %v356 = vadd.f32 %v344, %v351
    %v357 = vadd.f32 %v345, %v353
    %360 = vrot.lane.b32.xlu0 %v277, 96
    %v361 = vpop.permute.xlu0 %360
    %362 = vrot.lane.b32.xlu0 %v291, 96
    %v363 = vpop.permute.xlu0 %362
    %v366 = vadd.f32 %v346, %v361
    %v367 = vadd.f32 %v347, %v363
    %368 = vrot.lane.b32.xlu0 %v225, 64
    %v369 = vpop.permute.xlu0 %368
    %370 = vrot.lane.b32.xlu0 %v239, 64
    %v371 = vpop.permute.xlu0 %370
    %v374 = vadd.f32 %v356, %v369
    %v375 = vadd.f32 %v357, %v371
    %376 = vrot.lane.b32.xlu0 %v277, 64
    %v377 = vpop.permute.xlu0 %376
    %378 = vrot.lane.b32.xlu0 %v291, 64
    %v379 = vpop.permute.xlu0 %378
    %v382 = vadd.f32 %v366, %v377
    %v383 = vadd.f32 %v367, %v379
    %384 = vrot.lane.b32.xlu0 %v225, 32
    %v385 = vpop.permute.xlu0 %384
    %386 = vrot.lane.b32.xlu0 %v239, 32
    %v387 = vpop.permute.xlu0 %386
    %v390 = vadd.f32 %v374, %v385
    %v391 = vadd.f32 %v375, %v387
    %392 = vrot.lane.b32.xlu0 %v277, 32
    %v393 = vpop.permute.xlu0 %392
    %394 = vrot.lane.b32.xlu0 %v291, 32
    %v395 = vpop.permute.xlu0 %394
    %v398 = vadd.f32 %v382, %v393
    %v399 = vadd.f32 %v383, %v395
    %v400 = vmul.f32 %v390, 0.0625
    %v401 = vmul.f32 %v391, 0.0625
    %v402 = vmul.f32 %v398, 0.0625
    %v403 = vmul.f32 %v399, 0.0625
    %v404 = vmul.f32 %v400, %v400
    %v405 = vmul.f32 %v401, %v401
    %v406 = vsub.f32 %v402, %v404
    %v407 = vsub.f32 %v403, %v405
    %v408 = vmax.f32 %v406, 0.0
    %v409 = vmax.f32 %v407, 0.0
    %v410 = vadd.f32 %v408, 1e-05
    %v411 = vadd.f32 %v409, 1e-05
    %v412 = vrsqrt.pop %v410
    %v413 = vrsqrt.pop %v411
    %v416 = vrot.slane %v401, 7
    %vm417 = vcmask 1041409
    %v418 = vsel %vm417, %v416, %v400
    %420 = vrot.lane.b32.xlu0 %v418, 32
    %v421 = vpop.permute.xlu0 %420
    %423 = vrot.lane.b32.xlu0 %v418, 64
    %v424 = vpop.permute.xlu0 %423
    %426 = vrot.lane.b32.xlu0 %v418, 96
    %v427 = vpop.permute.xlu0 %426
    %vm429 = vcmask 261120
    %v430 = vsel %vm429, %v418, %v421
    %vm431 = vcmask 523264
    %v432 = vsel %vm431, %v430, %v424
    %vm433 = vcmask 785408
    %v434 = vsel %vm433, %v432, %v427
    %v437 = vrot.slane %v413, 7
    %v438 = vsel %vm417, %v437, %v412
    %440 = vrot.lane.b32.xlu0 %v438, 32
    %v441 = vpop.permute.xlu0 %440
    %443 = vrot.lane.b32.xlu0 %v438, 64
    %v444 = vpop.permute.xlu0 %443
    %446 = vrot.lane.b32.xlu0 %v438, 96
    %v447 = vpop.permute.xlu0 %446
    %v449 = vsel %vm429, %v438, %v441
    %v450 = vsel %vm431, %v449, %v444
    %v451 = vsel %vm433, %v450, %v447
    %v453 = vcombine.low %v434, %v434
    %v455 = vunpack.c.l.s4 1966171168
    %v456 = vunpack.c.0.s8 %v455
    %v457 = vlaneseq
    %v458 = vshrl.u32 %v457, 7
    %v459 = vsub.s32 %v456, %v458
    %v460 = vrot.slane %v453, %v459
    %v461 = vcombine.high %v460, %v460
    %v463 = vunpack.c.l.s4 1966171168
    %v464 = vunpack.c.0.s8 %v463
    %v465 = vlaneseq
    %v466 = vshrl.u32 %v465, 7
    %v467 = vsub.s32 %v464, %v466
    %v468 = vrot.slane %v460, %v467
    %v470 = vunpack.c.l.s4 1966171168
    %v471 = vunpack.c.0.s8 %v470
    %v472 = vlaneseq
    %v473 = vshrl.u32 %v472, 7
    %v474 = vsub.s32 %v471, %v473
    %v475 = vrot.slane %v461, %v474
    %v476 = vlaneseq
    %v477 = vshrl.u32 %v476, 7
    %v478 = vsub.s32 0, %v477
    %v479 = vrot.slane %v468, %v478
    %v480 = vlaneseq
    %v481 = vshrl.u32 %v480, 7
    %v482 = vsub.s32 1, %v481
    %v483 = vrot.slane %v468, %v482
    %v484 = vlaneseq
    %v485 = vshrl.u32 %v484, 7
    %v486 = vsub.s32 0, %v485
    %v487 = vrot.slane %v475, %v486
    %v488 = vlaneseq
    %v489 = vshrl.u32 %v488, 7
    %v490 = vsub.s32 1, %v489
    %v491 = vrot.slane %v475, %v490
    %v492 = vcombine.low %v479, %v483
    %v494 = vunpack.c.l.s4 1983009808
    %v495 = vunpack.c.0.s8 %v494
    %v496 = vlaneseq
    %v497 = vshrl.u32 %v496, 7
    %v498 = vsub.s32 %v495, %v497
    %v499 = vrot.slane %v492, %v498
    %v500 = vcombine.low %v487, %v491
    %v502 = vunpack.c.l.s4 1983009808
    %v503 = vunpack.c.0.s8 %v502
    %v504 = vlaneseq
    %v505 = vshrl.u32 %v504, 7
    %v506 = vsub.s32 %v503, %v505
    %v507 = vrot.slane %v500, %v506
    %v510 = vsub.f32 %v187, %v499
    %v511 = vsub.f32 %v188, %v507
    %v513 = vcombine.low %v451, %v451
    %v515 = vunpack.c.l.s4 1966171168
    %v516 = vunpack.c.0.s8 %v515
    %v517 = vlaneseq
    %v518 = vshrl.u32 %v517, 7
    %v519 = vsub.s32 %v516, %v518
    %v520 = vrot.slane %v513, %v519
    %v521 = vcombine.high %v520, %v520
    %v523 = vunpack.c.l.s4 1966171168
    %v524 = vunpack.c.0.s8 %v523
    %v525 = vlaneseq
    %v526 = vshrl.u32 %v525, 7
    %v527 = vsub.s32 %v524, %v526
    %v528 = vrot.slane %v520, %v527
    %v530 = vunpack.c.l.s4 1966171168
    %v531 = vunpack.c.0.s8 %v530
    %v532 = vlaneseq
    %v533 = vshrl.u32 %v532, 7
    %v534 = vsub.s32 %v531, %v533
    %v535 = vrot.slane %v521, %v534
    %v536 = vlaneseq
    %v537 = vshrl.u32 %v536, 7
    %v538 = vsub.s32 0, %v537
    %v539 = vrot.slane %v528, %v538
    %v540 = vlaneseq
    %v541 = vshrl.u32 %v540, 7
    %v542 = vsub.s32 1, %v541
    %v543 = vrot.slane %v528, %v542
    %v544 = vlaneseq
    %v545 = vshrl.u32 %v544, 7
    %v546 = vsub.s32 0, %v545
    %v547 = vrot.slane %v535, %v546
    %v548 = vlaneseq
    %v549 = vshrl.u32 %v548, 7
    %v550 = vsub.s32 1, %v549
    %v551 = vrot.slane %v535, %v550
    %v552 = vcombine.low %v539, %v543
    %v554 = vunpack.c.l.s4 1983009808
    %v555 = vunpack.c.0.s8 %v554
    %v556 = vlaneseq
    %v557 = vshrl.u32 %v556, 7
    %v558 = vsub.s32 %v555, %v557
    %v559 = vrot.slane %v552, %v558
    %v560 = vcombine.low %v547, %v551
    %v562 = vunpack.c.l.s4 1983009808
    %v563 = vunpack.c.0.s8 %v562
    %v564 = vlaneseq
    %v565 = vshrl.u32 %v564, 7
    %v566 = vsub.s32 %v563, %v565
    %v567 = vrot.slane %v560, %v566
    %v570 = vmul.f32 %v510, %v559
    %v571 = vmul.f32 %v511, %v567
    %572 = vst [vmem:[#allocation7] sm:$0xf] %v570
    %573 = vst [vmem:[#allocation7 + $0x4] sm:$0xf] %v571
    // Predicated region
    $region18: #{tpu_custom_call.1} parent=1 // pred_check
      _
    $region19: #{tpu_custom_call.1} parent=1 // pred_check_branch
      %575 = sbr.rel (0) target = $region21
    $region20: #{tpu_custom_call.1} parent=1 // pred_region
      %s577 = ssub.s32 128, 128
      %578 = vsyncadd [#allocation4], %s577
      %s579 = sshll.u32 [#allocation7], 4
      %s580 = int_to_ptr.vmem [resolvable:$true] %s579
      %585 = dma.vmem_to_hbm [thread:$0]  %s580, 128, %s2, [#allocation4], 64, 64, 4
    $region21: #{tpu_custom_call.1} parent=1 // pred_fallthru
      _
    // Predicated region
    $region22: #{tpu_custom_call.1} parent=1 // pred_check
      _
    $region23: #{tpu_custom_call.1} parent=1 // pred_check_branch
      %587 = sbr.rel (0) target = $region25
    $region24: #{tpu_custom_call.1} parent=1 // pred_region
      %588 = dma.done [#allocation4], 128
    $region25: #{tpu_custom_call.1} parent=1 // pred_fallthru
      _
    %589 = vsyncpa [#allocation3], 1
    %590 = vsyncpa [#allocation6], 1
    %591 = vsyncpa [#allocation4], 1

</llo_original>
